<compile_context>
chip_gen: v7x
topology: tpu7x:2x2x1
jax: 0.10.0
libtpu: 0.0.40
codegen_flags: <defaults>
</compile_context>

<pallas_src>
import jax
import jax.numpy as jnp
from jax.experimental import pallas as pl
from jax.experimental.pallas import tpu as pltpu


_COMPILER_PARAMS = pltpu.CompilerParams(
    # Single grid axis over pixel tiles; rows are independent, so shard across
    # the two TensorCores on v7x (harmless no-op on single-TC v5e/v6e).
    dimension_semantics=("parallel",),
    # Explicit VMEM budget: the tiles below are a few MiB total, well inside
    # v7x's 64 MiB physical VMEM (and v5e/v6e's 128 MiB).
    vmem_limit_bytes=48 * 1024 * 1024,
)

# Default pixel-tile size (rows of the (M, C) view). 512-2048 rows keeps the
# BlockSpec double-buffered DMA pipeline near the HBM roofline while staying
# tiny in VMEM even for production channel counts.
_DEFAULT_TM = 1024


def _round_up(x, m):
    return ((x + m - 1) // m) * m


def _pick_tm(m, tm):
    # Sublane-dim of a block must be a multiple of 8 (or equal the full dim).
    return min(tm, _round_up(m, 8))


# ----------------------------- Pallas kernels -----------------------------

def _conv_bias_kernel(x_ref, w_ref, b_ref, o_ref):
    # 1x1 conv == per-pixel channel matmul (MXU) + broadcast bias.
    acc = jnp.dot(x_ref[...], w_ref[...], preferred_element_type=jnp.float32)
    o_ref[...] = (acc + b_ref[...]).astype(o_ref.dtype)


def _conv_bias_add_kernel(x_ref, w_ref, b_ref, a_ref, o_ref):
    # Lateral conv fused with the top-down add: o = x @ w + b + a.
    acc = jnp.dot(x_ref[...], w_ref[...], preferred_element_type=jnp.float32)
    o_ref[...] = (acc + b_ref[...] + a_ref[...]).astype(o_ref.dtype)


def _add_kernel(a_ref, b_ref, o_ref):
    o_ref[...] = a_ref[...] + b_ref[...]


def _make_fuse_kernel(num_levels):
    # out = sum_l x_l @ w_l + b  (decomposed fuse conv; no channel concat).
    def kernel(*refs):
        x_refs = refs[:num_levels]
        w_refs = refs[num_levels:2 * num_levels]
        b_ref = refs[2 * num_levels]
        o_ref = refs[2 * num_levels + 1]
        acc = jnp.dot(x_refs[0][...], w_refs[0][...],
                      preferred_element_type=jnp.float32)
        for l in range(1, num_levels):
            acc += jnp.dot(x_refs[l][...], w_refs[l][...],
                           preferred_element_type=jnp.float32)
        o_ref[...] = (acc + b_ref[...]).astype(o_ref.dtype)
    return kernel


# ----------------------------- kernel wrappers -----------------------------

def conv1x1(x2d, w, b, add=None, *, tm=_DEFAULT_TM):
    """x2d: (M, Cin), w: (Cin, Cout), b: (1, Cout), add: optional (M, Cout)."""
    M, Cin = x2d.shape
    Cout = w.shape[1]
    TM = _pick_tm(M, tm)
    grid = (pl.cdiv(M, TM),)
    x_spec = pl.BlockSpec((TM, Cin), lambda i: (i, 0))
    w_spec = pl.BlockSpec((Cin, Cout), lambda i: (0, 0))   # resident weights
    b_spec = pl.BlockSpec((1, Cout), lambda i: (0, 0))
    o_spec = pl.BlockSpec((TM, Cout), lambda i: (i, 0))
    if add is None:
        return pl.pallas_call(
            _conv_bias_kernel,
            out_shape=jax.ShapeDtypeStruct((M, Cout), x2d.dtype),
            grid=grid,
            in_specs=[x_spec, w_spec, b_spec],
            out_specs=o_spec,
            compiler_params=_COMPILER_PARAMS,
        )(x2d, w, b)
    a_spec = pl.BlockSpec((TM, Cout), lambda i: (i, 0))
    return pl.pallas_call(
        _conv_bias_add_kernel,
        out_shape=jax.ShapeDtypeStruct((M, Cout), x2d.dtype),
        grid=grid,
        in_specs=[x_spec, w_spec, b_spec, a_spec],
        out_specs=o_spec,
        compiler_params=_COMPILER_PARAMS,
    )(x2d, w, b, add)


def add2d(a2d, b2d, *, tm=_DEFAULT_TM):
    M, C = a2d.shape
    TM = _pick_tm(M, tm)
    spec = pl.BlockSpec((TM, C), lambda i: (i, 0))
    return pl.pallas_call(
        _add_kernel,
        out_shape=jax.ShapeDtypeStruct((M, C), a2d.dtype),
        grid=(pl.cdiv(M, TM),),
        in_specs=[spec, spec],
        out_specs=spec,
        compiler_params=_COMPILER_PARAMS,
    )(a2d, b2d)


def fuse_conv1x1(xs, ws, b, *, tm=_DEFAULT_TM):
    """out = sum_l xs[l] @ ws[l] + b, without materializing the concat."""
    L = len(xs)
    M, C = xs[0].shape
    Cout = ws[0].shape[1]
    TM = _pick_tm(M, tm)
    in_specs = (
        [pl.BlockSpec((TM, C), lambda i: (i, 0)) for _ in range(L)]
        + [pl.BlockSpec((C, Cout), lambda i: (0, 0)) for _ in range(L)]
        + [pl.BlockSpec((1, Cout), lambda i: (0, 0))]
    )
    return pl.pallas_call(
        _make_fuse_kernel(L),
        out_shape=jax.ShapeDtypeStruct((M, Cout), xs[0].dtype),
        grid=(pl.cdiv(M, TM),),
        in_specs=in_specs,
        out_specs=pl.BlockSpec((TM, Cout), lambda i: (i, 0)),
        compiler_params=_COMPILER_PARAMS,
    )(*xs, *ws, b)


# ------------------------------- JAX glue ----------------------------------

def interp_nearest_nhwc(x, out_hw):
    """Matches torch F.interpolate(mode='nearest'): src = floor(dst*in/out)."""
    N, H, W, C = x.shape
    Ho, Wo = out_hw
    if (H, W) == (Ho, Wo):
        return x
    rows = (jnp.arange(Ho) * H) // Ho
    cols = (jnp.arange(Wo) * W) // Wo
    return x[:, rows][:, :, cols]


def init_params(key, in_channels_list, out_channels):
    params = {"lateral": []}
    for i, c in enumerate(in_channels_list):
        kw, kb = jax.random.split(jax.random.fold_in(key, i))
        w = jax.random.normal(kw, (c, out_channels), jnp.float32) / jnp.sqrt(float(c))
        b = 0.01 * jax.random.normal(kb, (1, out_channels), jnp.float32)
        params["lateral"].append((w, b))
    cin_fuse = out_channels * len(in_channels_list)
    kw, kb = jax.random.split(jax.random.fold_in(key, 1000))
    wf = jax.random.normal(kw, (cin_fuse, out_channels), jnp.float32) / jnp.sqrt(float(cin_fuse))
    bf = 0.01 * jax.random.normal(kb, (1, out_channels), jnp.float32)
    params["fuse"] = (wf, bf)
    return params


def bifpn_forward(features_nchw, params, in_channels_list, out_channels):
    assert len(features_nchw) == len(in_channels_list)
    for f, c in zip(features_nchw, in_channels_list):
        assert f.shape[1] == c  # inputs supplied in correct NCHW layout

    L = len(features_nchw)
    # NCHW -> NHWC once at the boundary; everything downstream stays
    # channels-last so kernel loads/stores are lane-dense.
    feats = [jnp.transpose(f, (0, 2, 3, 1)) for f in features_nchw]
    shapes = [f.shape for f in feats]

    def flat(x):
        N, H, W, C = x.shape
        return x.reshape(N * H * W, C)

    def unflat(x2d, nhwc_shape):
        N, H, W, _ = nhwc_shape
        return x2d.reshape(N, H, W, x2d.shape[-1])

    # Top level: plain lateral conv. Lower levels: lateral conv fused with the
    # top-down add (one fewer HBM round trip of an (M, Cout) tensor per level).
    p = [None] * L
    w, b = params["lateral"][L - 1]
    p[L - 1] = unflat(conv1x1(flat(feats[L - 1]), w, b), shapes[L - 1])
    for i in range(L - 2, -1, -1):
        up = interp_nearest_nhwc(p[i + 1], shapes[i][1:3])
        w, b = params["lateral"][i]
        p[i] = unflat(conv1x1(flat(feats[i]), w, b, add=flat(up)), shapes[i])
    # TODO(synk): fuse the nearest-neighbour gather itself into the kernels via
    # a scalar-prefetched row table to drop one more HBM pass per pathway step.

    # Bottom-up pathway: p[i] += nearest-resize(p[i-1]).
    for i in range(1, L):
        dn = interp_nearest_nhwc(p[i - 1], shapes[i][1:3])
        p[i] = unflat(add2d(flat(p[i]), flat(dn)), shapes[i])

    # Fuse conv decomposed per level: out = sum_l resize(p[l]) @ wf_l + bf.
    tgt = shapes[0][1:3]
    xs = [flat(interp_nearest_nhwc(pi, tgt)) for pi in p]
    wf, bf = params["fuse"]
    ws = [wf[l * out_channels:(l + 1) * out_channels] for l in range(L)]
    out = unflat(fuse_conv1x1(xs, ws, bf), shapes[0])
    return jnp.transpose(out, (0, 3, 1, 2))  # back to NCHW


# ----------------------- pure-JAX reference (for check) ---------------------

def bifpn_reference(features_nchw, params, out_channels):
    hi = jax.lax.Precision.HIGHEST
    feats = [jnp.transpose(f, (0, 2, 3, 1)) for f in features_nchw]
    p = []
    for i, f in enumerate(feats):
        w, b = params["lateral"][i]
        p.append(jnp.einsum("nhwc,cd->nhwd", f, w, precision=hi) + b[0])
    L = len(p)
    for i in range(L - 2, -1, -1):
        p[i] = p[i] + interp_nearest_nhwc(p[i + 1], p[i].shape[1:3])
    for i in range(1, L):
        p[i] = p[i] + interp_nearest_nhwc(p[i - 1], p[i].shape[1:3])
    tgt = p[0].shape[1:3]
    cat = jnp.concatenate([interp_nearest_nhwc(f, tgt) for f in p], axis=-1)
    wf, bf = params["fuse"]
    out = jnp.einsum("nhwc,cd->nhwd", cat, wf, precision=hi) + bf[0]
    return jnp.transpose(out, (0, 3, 1, 2))


# --------------------------------- main -------------------------------------

if __name__ == "__main__":
    key = jax.random.PRNGKey(0)
    in_channels_list = [4, 8, 16]
    out_channels = 128          # lane-dense intermediates (multiple of 128)
    batch = 2
    spatials = [16, 8, 4]

    # Deterministic example pyramid features (NCHW, like PyTorch).
    feat_keys = jax.random.split(key, len(in_channels_list) + 1)
    features = [
        jax.random.normal(feat_keys[i], (batch, c, s, s), jnp.float32)
        for i, (c, s) in enumerate(zip(in_channels_list, spatials))
    ]
    params = init_params(feat_keys[-1], in_channels_list, out_channels)

    out = bifpn_forward(features, params, in_channels_list, out_channels)
    out = jax.block_until_ready(out)
    assert out.shape == (batch, out_channels, spatials[0], spatials[0])

    ref = jax.block_until_ready(bifpn_reference(features, params, out_channels))
    err = float(jnp.max(jnp.abs(out - ref)))
    assert err < 1e-2, f"max abs error vs reference: {err}"
    print("KERNEL_OK")
</pallas_src>

<mosaic_0001>
module attributes {stable_mosaic.version = 11 : i64} {
  func.func @_conv_bias_kernel(%arg0: i32, %arg1: memref<32x16xf32, #tpu.memory_space<vmem>>, %arg2: memref<16x128xf32, #tpu.memory_space<vmem>>, %arg3: memref<1x128xf32, #tpu.memory_space<vmem>>, %arg4: memref<32x128xf32, #tpu.memory_space<vmem>>) attributes {dimension_semantics = [#tpu.dimension_semantics<parallel>], iteration_bounds = array<i64: 1>, scalar_prefetch = 0 : i64, scratch_operands = 0 : i64, tpu.core_type = #tpu.core_type<tc>, window_params = [{transform_indices = @transform_0, window_bounds = array<i64: 32, 16>}, {pipeline_mode = #tpu.pipeline_mode<synchronous>, transform_indices = @transform_1, window_bounds = array<i64: 16, 128>}, {pipeline_mode = #tpu.pipeline_mode<synchronous>, transform_indices = @transform_2, window_bounds = array<i64: 1, 128>}, {transform_indices = @transform_3, window_bounds = array<i64: 32, 128>}]} {
    %c0 = arith.constant 0 : index
    %c0_0 = arith.constant 0 : index
    %0 = vector.load %arg1[%c0, %c0_0] : memref<32x16xf32, #tpu.memory_space<vmem>>, vector<32x16xf32>
    %c0_1 = arith.constant 0 : index
    %c0_2 = arith.constant 0 : index
    %1 = vector.load %arg2[%c0_1, %c0_2] : memref<16x128xf32, #tpu.memory_space<vmem>>, vector<16x128xf32>
    %cst = arith.constant dense<0.000000e+00> : vector<32x128xf32>
    %2 = tpu.matmul %0, %1, %cst {dimension_numbers = #tpu.dot_dimension_numbers<[1], [0], [0], [1], [0, 0, 1, 1], [], []>} : vector<32x16xf32>, vector<16x128xf32>, vector<32x128xf32> -> vector<32x128xf32>
    %c0_3 = arith.constant 0 : index
    %c0_4 = arith.constant 0 : index
    %3 = vector.load %arg3[%c0_3, %c0_4] : memref<1x128xf32, #tpu.memory_space<vmem>>, vector<1x128xf32>
    %4 = vector.broadcast %3 : vector<1x128xf32> to vector<32x128xf32>
    %5 = arith.addf %2, %4 : vector<32x128xf32>
    %c0_5 = arith.constant 0 : index
    %c0_6 = arith.constant 0 : index
    %6 = vector.load %arg4[%c0_5, %c0_6] : memref<32x128xf32, #tpu.memory_space<vmem>>, vector<32x128xf32>
    tpu.vector_store %arg4[%c0_5, %c0_6], %5 {strides = array<i32>} : memref<32x128xf32, #tpu.memory_space<vmem>>, vector<32x128xf32>,
    return
  }
  func.func @transform_0(%arg0: i32) -> (i32, i32) {
    %c0_i32 = arith.constant 0 : i32
    %c0_i32_0 = arith.constant 0 : i32
    return %arg0, %c0_i32 : i32, i32
  }
  func.func @transform_1(%arg0: i32) -> (i32, i32) {
    %c0_i32 = arith.constant 0 : i32
    %c0_i32_0 = arith.constant 0 : i32
    %c0_i32_1 = arith.constant 0 : i32
    return %c0_i32, %c0_i32_0 : i32, i32
  }
  func.func @transform_2(%arg0: i32) -> (i32, i32) {
    %c0_i32 = arith.constant 0 : i32
    %c0_i32_0 = arith.constant 0 : i32
    %c0_i32_1 = arith.constant 0 : i32
    return %c0_i32, %c0_i32_0 : i32, i32
  }
  func.func @transform_3(%arg0: i32) -> (i32, i32) {
    %c0_i32 = arith.constant 0 : i32
    %c0_i32_0 = arith.constant 0 : i32
    return %arg0, %c0_i32 : i32, i32
  }
}

</mosaic_0001>

<llo_original>
// kernel: tpu_custom_call.1
$region0: #{tpu_custom_call.1}
  #allocation0 [shape = 'u32[]', space=smem, size = 0x4, offset = 0x4, fixed_abs, tag = 'smem constant byte address 0x4 - core index']
  #allocation1 [shape = 'u32[144,128]{1,0:T(1,128)}', space=vmem, size = 0x12000, scoped, tag = 'internal scratch']
  %s0 = inlined_call_operand.vmem [shape: f32[32,16], index: 0, kind: input, shape index: {}]
  %s1 = inlined_call_operand.vmem [shape: f32[16,128], index: 1, kind: input, shape index: {}]
  %s2 = inlined_call_operand.vmem [shape: f32[1,128], index: 2, kind: input, shape index: {}]
  %s3 = inlined_call_operand.hbm [shape: f32[32,128], index: 3, kind: output, shape index: {}]
  %s4 = sld [smem:[#allocation0]]
  $region22: #{tpu_custom_call.1} parent=0
    _
  %s6 = ssub.s32 1, %s4
  %s7 = scalar_select 0, %s6, %s4
  $region1: #{tpu_custom_call.1} parent=0
    #allocation2 [shape = 'u8[16384]{0}', space=vmem, size = 0x4000, scoped, tag = 'output window, operand 0, single buffered']
    #allocation3 [shape = 's32[1]{0}', space=sflag, size = 0x4, scoped, tag = 'scoped memory for tpu_custom_call.1']
    %8 = vsyncpa [#allocation3], 0
    // Predicated region
    $region2: #{tpu_custom_call.1} parent=1 // pred_check
      _
    $region3: #{tpu_custom_call.1} parent=1 // pred_check_branch
      %10 = sbr.rel (0) target = $region5
    $region4: #{tpu_custom_call.1} parent=1 // pred_region
      _
    $region5: #{tpu_custom_call.1} parent=1 // pred_fallthru
      _
    // Predicated region
    $region6: #{tpu_custom_call.1} parent=1 // pred_check
      _
    $region7: #{tpu_custom_call.1} parent=1 // pred_check_branch
      %12 = sbr.rel (0) target = $region9
    $region8: #{tpu_custom_call.1} parent=1 // pred_region
      _
    $region9: #{tpu_custom_call.1} parent=1 // pred_fallthru
      _
    // Predicated region
    $region10: #{tpu_custom_call.1} parent=1 // pred_check
      _
    $region11: #{tpu_custom_call.1} parent=1 // pred_check_branch
      %14 = sbr.rel (0) target = $region13
    $region12: #{tpu_custom_call.1} parent=1 // pred_region
      _
    $region13: #{tpu_custom_call.1} parent=1 // pred_fallthru
      _
    %v15 = vld [vmem:[%s0] sm:$0xff]
    %v16 = vld [vmem:[%s0 + $0x8] sm:$0xff]
    %v17 = vld [vmem:[%s0 + $0x10] sm:$0xff]
    %v18 = vld [vmem:[%s0 + $0x18] sm:$0xff]
    %v19 = vld [vmem:[%s1] sm:$0xff]
    %v20 = vld [vmem:[%s1 + $0x8] sm:$0xff]
    %v21 = vld [vmem:[%s2] sm:$0x1]
    %v23 = vlaneseq
    %v24 = vshrl.u32 %v23, 7
    %v25 = vsub.s32 0, %v24
    %v26 = vrot.slane %v21, %v25
    %vm28 = vcmask 130048
    %v30 = vsel %vm28, %v15, 0
    %v33 = vsel %vm28, %v16, 0
    %v36 = vsel %vm28, %v17, 0
    %v39 = vsel %vm28, %v18, 0
    %41 = vmatprep.subr.mxu0 0.0
    %42 = vmatpush1.msra.mxu0 %v19
    %43 = vmatprep.subr.mxu0 0.0
    %44 = vmatpush1.msra.mxu0 %v20
    %45 = vmatprep.subr.mxu0 0.0
    %46 = vmatpush1.msra.mxu0 0.0
    %47 = vmatprep.subr.mxu0 0.0
    %48 = vmatpush1.msra.mxu0 0.0
    %49 = vmatprep.subr.mxu0 0.0
    %50 = vmatpush1.msra.mxu0 0.0
    %51 = vmatprep.subr.mxu0 0.0
    %52 = vmatpush1.msra.mxu0 0.0
    %53 = vmatprep.subr.mxu0 0.0
    %54 = vmatpush1.msra.mxu0 0.0
    %55 = vmatprep.subr.mxu0 0.0
    %56 = vmatpush1.msra.mxu0 0.0
    %57 = vmatprep.subr.mxu0 0.0
    %58 = vmatpush1.msra.mxu0 0.0
    %59 = vmatprep.subr.mxu0 0.0
    %60 = vmatpush1.msra.mxu0 0.0
    %61 = vmatprep.subr.mxu0 0.0
    %62 = vmatpush1.msra.mxu0 0.0
    %63 = vmatprep.subr.mxu0 0.0
    %64 = vmatpush1.msra.mxu0 0.0
    %65 = vmatprep.subr.mxu0 0.0
    %66 = vmatpush1.msra.mxu0 0.0
    %67 = vmatprep.subr.mxu0 0.0
    %68 = vmatpush1.msra.mxu0 0.0
    %69 = vmatprep.subr.mxu0 0.0
    %70 = vmatpush1.msra.mxu0 0.0
    %71 = vmatprep.subr.mxu0 0.0
    %72 = vmatpush1.msra.mxu0 0.0
    %73 = vmatprep.subr.mxu0 0.0
    %74 = vmatpush1.msra.mxu0 0.0
    %75 = vmatprep.subr.mxu0 0.0
    %76 = vmatpush1.msra.mxu0 0.0
    %77 = vmatprep.subr.mxu0 0.0
    %78 = vmatpush1.msra.mxu0 0.0
    %79 = vmatprep.subr.mxu0 0.0
    %80 = vmatpush1.msra.mxu0 0.0
    %81 = vmatprep.subr.mxu0 0.0
    %82 = vmatpush1.msra.mxu0 0.0
    %83 = vmatprep.subr.mxu0 0.0
    %84 = vmatpush1.msra.mxu0 0.0
    %85 = vmatprep.subr.mxu0 0.0
    %86 = vmatpush1.msra.mxu0 0.0
    %87 = vmatprep.subr.mxu0 0.0
    %88 = vmatpush1.msra.mxu0 0.0
    %89 = vmatprep.subr.mxu0 0.0
    %90 = vmatpush1.msra.mxu0 0.0
    %91 = vmatprep.subr.mxu0 0.0
    %92 = vmatpush1.msra.mxu0 0.0
    %93 = vmatprep.subr.mxu0 0.0
    %94 = vmatpush1.msra.mxu0 0.0
    %95 = vmatprep.subr.mxu0 0.0
    %96 = vmatpush1.msra.mxu0 0.0
    %97 = vmatprep.subr.mxu0 0.0
    %98 = vmatpush1.msra.mxu0 0.0
    %99 = vmatprep.subr.mxu0 0.0
    %100 = vmatpush1.msra.mxu0 0.0
    %101 = vmatprep.subr.mxu0 0.0
    %102 = vmatpush1.msra.mxu0 0.0
    %103 = vmatprep.subr.mxu0 0.0
    %104 = vmatpush1.msra.mxu0 0.0
    %105 = vmatprep.mubr.f32.mxu0 0.0
    %106 = vmatmul.mubr.f32.gmra.mrb[0].mxu0 %v30
    %v107 = vpop.f32.mrb[0].mxu0
    %v108 = vadd.f32 %v26, %v107
    %v109 = vpop.f32.mrb[0].mxu0
    %110 = vmatprep.mubr.f32.mxu0 0.0
    %111 = vmatmul.mubr.f32.gmra.mrb[0].mxu0 %v33
    %v112 = vpop.f32.mrb[0].mxu0
    %v113 = vadd.f32 %v26, %v112
    %v114 = vpop.f32.mrb[0].mxu0
    %115 = vmatprep.mubr.f32.mxu0 0.0
    %116 = vmatmul.mubr.f32.gmra.mrb[0].mxu0 %v36
    %v117 = vpop.f32.mrb[0].mxu0
    %v118 = vadd.f32 %v26, %v117
    %v119 = vpop.f32.mrb[0].mxu0
    %120 = vmatprep.mubr.f32.mxu0 0.0
    %121 = vmatmul.mubr.f32.gmra.mrb[0].mxu0 %v39
    %v122 = vpop.f32.mrb[0].mxu0
    %v123 = vadd.f32 %v26, %v122
    %v124 = vpop.f32.mrb[0].mxu0
    %125 = vdwg.mxu0
    %126 = vst [vmem:[#allocation2] sm:$0xff] %v108
    %127 = vst [vmem:[#allocation2 + $0x8] sm:$0xff] %v113
    %128 = vst [vmem:[#allocation2 + $0x10] sm:$0xff] %v118
    %129 = vst [vmem:[#allocation2 + $0x18] sm:$0xff] %v123
    // Predicated region
    $region14: #{tpu_custom_call.1} parent=1 // pred_check
      _
    $region15: #{tpu_custom_call.1} parent=1 // pred_check_branch
      %131 = sbr.rel (0) target = $region17
    $region16: #{tpu_custom_call.1} parent=1 // pred_region
      %s133 = ssub.s32 512, 512
      %134 = vsyncadd [#allocation3], %s133
      %s135 = sshll.u32 [#allocation2], 4
      %s136 = int_to_ptr.vmem [resolvable:$true] %s135
      %141 = dma.vmem_to_hbm [thread:$0]  %s136, 512, %s3, [#allocation3], 128, 128, 8
    $region17: #{tpu_custom_call.1} parent=1 // pred_fallthru
      _
    // Predicated region
    $region18: #{tpu_custom_call.1} parent=1 // pred_check
      _
    $region19: #{tpu_custom_call.1} parent=1 // pred_check_branch
      %143 = sbr.rel (0) target = $region21
    $region20: #{tpu_custom_call.1} parent=1 // pred_region
      %144 = dma.done [#allocation3], 512
    $region21: #{tpu_custom_call.1} parent=1 // pred_fallthru
      _
    %145 = vsyncpa [#allocation3], 1

</llo_original>
